<compile_context>
chip_gen: v5e
topology: v5e:2x2
jax: 0.10.0
libtpu: 0.0.40
codegen_flags: <defaults>
</compile_context>

<pallas_src>
import numpy as np
import jax
import jax.numpy as jnp
from jax.experimental import pallas as pl
from jax.experimental.pallas import tpu as pltpu

_LANE = 128
_SUBLANE = 8


def _round_up(v, m):
    return ((v + m - 1) // m) * m


def _vmem_budget_bytes():
    """Generation-aware VMEM budget (~75% of physical, capped at 100 MiB)."""
    try:
        cap = int(pltpu.get_tpu_info().vmem_capacity_bytes)
    except Exception:  # pragma: no cover - conservative fallback (v7x-safe)
        cap = 64 * 1024 * 1024
    return min((cap * 3) // 4, 100 * 1024 * 1024)


def _log_sigmoid(z):
    # log(sigmoid(z)) = -(max(-z, 0) + log(1 + exp(-|z|)))
    # Numerically stable (no 1 - sigmoid cancellation), Mosaic-friendly ops only.
    return -(jnp.maximum(-z, 0.0) + jnp.log(1.0 + jnp.exp(-jnp.abs(z))))


def _soft_tree_kernel(x_ref, w_ref, b_ref, s_ref, phi_ref, out_ref):
    """One batch tile: three MXU matmuls + elementwise log/exp.
    Node/leaf/phi dims are 128-padded so every vector op / store is lane-dense.
    Matmul operands arrive pre-cast wrapper-side; accumulation is always f32."""
    logits = jnp.dot(x_ref[...], w_ref[...],
                     preferred_element_type=jnp.float32) + b_ref[...]    # (TB, Npad) f32

    # log P(right) and log P(left) at each internal node with ONE log-sigmoid:
    #   log_sigmoid(-z) = log_sigmoid(z) - z   (halves EUP work vs. two calls).
    log_right = _log_sigmoid(logits)
    log_cat = jnp.concatenate([log_right, log_right - logits], axis=-1)  # (TB, 2*Npad)

    # Sum the log-factors along every root->leaf path with one matmul against
    # the constant 0/1 selection matrix (padded rows/cols are all-zero).
    log_path = jnp.dot(log_cat.astype(s_ref.dtype), s_ref[...],
                       preferred_element_type=jnp.float32)               # (TB, Lpad)
    path_prob = jnp.exp(log_path)

    # Leaf-weighted sum folded into one more matmul: (TB, Lpad) @ (Lpad, Ppad).
    pred = jnp.dot(path_prob.astype(phi_ref.dtype), phi_ref[...],
                   preferred_element_type=jnp.float32)
    out_ref[...] = pred.astype(out_ref.dtype)


def _build_selection_matrix(depth, n_pad, l_pad):
    """Fused 0/1 selection matrix S_cat of shape (2*n_pad, l_pad):
         S_cat[n,         l] = 1 iff node n is an ancestor of leaf l and l goes RIGHT at n
         S_cat[n_pad + n, l] = 1 iff node n is an ancestor of leaf l and l goes LEFT  at n
       Internal nodes are heap/BFS ordered (root=0, children of i at 2i+1/2i+2),
       leaves left-to-right -- matching the module's collect_trainables order."""
    n_leaves = 1 << depth
    s_cat = np.zeros((2 * n_pad, l_pad), dtype=np.float32)
    for leaf in range(n_leaves):
        for d in range(depth):
            prefix = leaf >> (depth - d)             # ancestor among level-d nodes
            node = (1 << d) - 1 + prefix             # heap index of that node
            go_right = (leaf >> (depth - 1 - d)) & 1
            s_cat[(0 if go_right else n_pad) + node, leaf] = 1.0
    return s_cat


def _choose_batch_tile(batch, input_dim, n_pad, l_pad, p_pad, requested_tb,
                       param_bytes, vmem_budget):
    """Largest MXU-friendly batch tile <= requested that fits the VMEM budget."""
    # Constant params are single-buffered (counted once); only the x / out tiles
    # are double-buffered by the pipeline.
    resident = (param_bytes * (input_dim * n_pad + 2 * n_pad * l_pad + l_pad * p_pad)
                + 4 * _SUBLANE * n_pad)

    def est(tb):
        tiled = 2 * tb * (param_bytes * input_dim + 4 * p_pad)     # x + out tiles (2x buffered)
        temps = 4 * tb * (4 * n_pad + 3 * l_pad + 2 * p_pad)       # generous temp bound
        return resident + tiled + temps

    tb = min(requested_tb, _round_up(max(batch, 1), _SUBLANE))
    # v7x has 2 TensorCores: keep >= 2 grid tiles for large batches so the
    # "parallel" grid axis can shard across both.
    if batch >= 2 * _LANE:
        tb = min(tb, _round_up(pl.cdiv(batch, 2), _LANE))
    # Snap to MXU-shaped M granularity (256 / 128 rows when large enough).
    gran = 256 if tb >= 256 else (_LANE if tb >= _LANE else _SUBLANE)
    tb = _round_up(tb, gran)
    while est(tb) > vmem_budget and tb > _SUBLANE:
        nxt = max(_SUBLANE, tb // 2)
        g = 256 if nxt >= 256 else (_LANE if nxt >= _LANE else _SUBLANE)
        tb = max(g, _round_up(nxt, g))
    return tb, est(tb)


def soft_decision_tree_forward(x, w, b, phi, *, depth, phi_numel,
                               block_batch=1024, mxu_dtype=jnp.bfloat16):
    """x: (B, input_dim); w: (input_dim, n_internal) with column n = weight of
    internal node n in BFS/heap order; b: (1, n_internal) or (n_internal,);
    phi: (n_leaves, phi_numel), leaves left-to-right. Returns (B, phi_numel) f32.
    `mxu_dtype` is the matmul-operand dtype (accumulation is always f32); bf16 is
    the native MXU throughput path on v6e/v7x. Pass jnp.float32 if the log-path
    matmul must see unrounded log-probabilities (tighter accuracy)."""
    n_internal = (1 << depth) - 1
    n_leaves = 1 << depth

    x = jnp.asarray(x, jnp.float32)
    w = jnp.asarray(w, jnp.float32)
    b = jnp.asarray(b, jnp.float32).reshape(1, n_internal)
    phi = jnp.asarray(phi, jnp.float32)
    batch, input_dim = x.shape
    assert w.shape == (input_dim, n_internal)
    assert phi.shape == (n_leaves, phi_numel)

    op_dtype = jnp.dtype(mxu_dtype)
    param_bytes = op_dtype.itemsize

    # Lane-dense padding of node / leaf / phi dims (unmasked vector ops/stores).
    n_pad = _round_up(n_internal, _LANE)
    l_pad = _round_up(n_leaves, _LANE)
    p_pad = _round_up(phi_numel, _LANE)
    # Note: for depth >= ~10 the dense O(4^depth) selection matrix should be
    # tiled over the leaf dim (second "arbitrary" grid axis) instead of kept
    # fully VMEM-resident; small/medium trees (the common case) fit easily.
    # Note: for phi_numel << 128 the (rows, 128)-padded output inflates HBM
    # writeback; acceptable here because the kernel output stays lane-dense.

    vmem_budget = _vmem_budget_bytes()
    tb, vmem_est = _choose_batch_tile(batch, input_dim, n_pad, l_pad, p_pad,
                                      block_batch, param_bytes, vmem_budget)
    rows_pad = _round_up(max(batch, 1), tb)
    grid = (rows_pad // tb,)

    # Operands, zero-padded and pre-cast to the MXU operand dtype once
    # (wrapper-side -- no per-grid-step converts in the kernel). Padded
    # nodes/leaves contribute nothing: their S rows/cols and phi rows are zero.
    if rows_pad == batch:
        x_p = x.astype(op_dtype)                     # no pad copy in the common case
    else:
        x_p = jnp.zeros((rows_pad, input_dim), op_dtype).at[:batch].set(
            x.astype(op_dtype))
    w_p = jnp.zeros((input_dim, n_pad), op_dtype).at[:, :n_internal].set(
        w.astype(op_dtype))
    b_p = jnp.zeros((1, n_pad), jnp.float32).at[:, :n_internal].set(b)  # f32: added to f32 acc
    phi_p = jnp.zeros((l_pad, p_pad), op_dtype).at[:n_leaves, :phi_numel].set(
        phi.astype(op_dtype))
    s_cat = jnp.asarray(_build_selection_matrix(depth, n_pad, l_pad),
                        op_dtype)                    # 0/1 entries: exact in bf16

    cost = pl.CostEstimate(
        flops=int(2 * rows_pad * (input_dim * n_pad + 2 * n_pad * l_pad
                                  + l_pad * p_pad)),
        transcendentals=int(rows_pad * (2 * n_pad + l_pad)),
        bytes_accessed=int(param_bytes * (rows_pad * input_dim + input_dim * n_pad
                                          + 2 * n_pad * l_pad + l_pad * p_pad)
                           + 4 * (rows_pad * p_pad + n_pad)),
    )

    def _run(single_buffer_params):
        def const_spec(shape):
            # Constant index_map -> a second (double) buffer is pure waste.
            if single_buffer_params:
                return pl.BlockSpec(shape, lambda i: (0, 0),
                                    pipeline_mode=pl.Buffered(1))
            return pl.BlockSpec(shape, lambda i: (0, 0))

        return pl.pallas_call(
            _soft_tree_kernel,
            out_shape=jax.ShapeDtypeStruct((rows_pad, p_pad), jnp.float32),
            grid=grid,
            in_specs=[
                pl.BlockSpec((tb, input_dim), lambda i: (i, 0)),   # batch-tiled x
                const_spec((input_dim, n_pad)),                    # W
                const_spec((1, n_pad)),                            # b
                const_spec((2 * n_pad, l_pad)),                    # S_cat
                const_spec((l_pad, p_pad)),                        # phi
            ],
            out_specs=pl.BlockSpec((tb, p_pad), lambda i: (i, 0)),
            compiler_params=pltpu.CompilerParams(
                # batch tiles are independent -> shard grid across TCs on v7x
                dimension_semantics=("parallel",),
                vmem_limit_bytes=int(min(max(2 * vmem_est, 32 << 20), vmem_budget)),
            ),
            cost_estimate=cost,
        )(x_p, w_p, b_p, s_cat, phi_p)

    try:
        out = _run(True)
    except Exception:  # pragma: no cover - jax without per-spec pipeline_mode
        out = _run(False)

    if rows_pad == batch and p_pad == phi_numel:
        return out
    return out[:batch, :phi_numel]


def soft_decision_tree_ref(x, w, b, phi, *, depth, phi_numel):
    """Pure-JAX reference mirroring the PyTorch recursion (direct products)."""
    probs = jax.nn.sigmoid(x @ w + b.reshape(1, -1))         # (B, n_internal)
    B = x.shape[0]
    pred = jnp.zeros((B, phi_numel), dtype=jnp.float32)
    for leaf in range(1 << depth):
        pp = jnp.ones((B, 1), dtype=jnp.float32)
        for d in range(depth):
            prefix = leaf >> (depth - d)
            node = (1 << d) - 1 + prefix
            go_right = (leaf >> (depth - 1 - d)) & 1
            p_node = probs[:, node:node + 1]
            pp = pp * (p_node if go_right else (1.0 - p_node))
        pred = pred + pp * phi[leaf, :]
    return pred


if __name__ == "__main__":
    # Small shapes consistent with the module's forward.
    depth = 3              # -> 7 internal nodes, 8 leaves
    input_dim = 32
    phi_numel = 4
    batch = 8

    n_internal = (1 << depth) - 1
    n_leaves = 1 << depth

    key = jax.random.PRNGKey(0)
    kx, kw, kb, kp, kx2 = jax.random.split(key, 5)

    bound = 1.0 / (input_dim ** 0.5)
    x = jax.random.normal(kx, (batch, input_dim), dtype=jnp.float32)
    w = jax.random.uniform(kw, (input_dim, n_internal), jnp.float32, -bound, bound)
    b = jax.random.uniform(kb, (1, n_internal), jnp.float32, -bound, bound)
    phi = jax.random.normal(kp, (n_leaves, phi_numel), dtype=jnp.float32)

    # Tolerances account for bf16 MXU operands (f32 accumulation) and TPU default
    # f32 matmul precision vs. the f32 elementwise reference; structural/indexing
    # bugs would produce O(1) errors and still be caught.
    ref = soft_decision_tree_ref(x, w, b, phi, depth=depth, phi_numel=phi_numel)

    # Default path: bf16 MXU operands, f32 accumulation (v6e/v7x throughput path).
    out = jax.block_until_ready(
        soft_decision_tree_forward(x, w, b, phi, depth=depth, phi_numel=phi_numel))
    assert out.shape == (batch, phi_numel)
    assert jnp.allclose(out, ref, atol=5e-2, rtol=5e-2)

    # Full-f32 operand path.
    out_f32 = jax.block_until_ready(soft_decision_tree_forward(
        x, w, b, phi, depth=depth, phi_numel=phi_numel, mxu_dtype=jnp.float32))
    assert jnp.allclose(out_f32, ref, atol=5e-2, rtol=5e-2)

    # Multi-tile batch grid (3 tiles of 8 rows) exercises the pipelined grid.
    x2 = jax.random.normal(kx2, (24, input_dim), dtype=jnp.float32)
    ref2 = soft_decision_tree_ref(x2, w, b, phi, depth=depth, phi_numel=phi_numel)
    out2 = jax.block_until_ready(soft_decision_tree_forward(
        x2, w, b, phi, depth=depth, phi_numel=phi_numel, block_batch=8))
    assert out2.shape == (24, phi_numel)
    assert jnp.allclose(out2, ref2, atol=5e-2, rtol=5e-2)

    print("KERNEL_OK")
</pallas_src>

<mosaic_0001>
module attributes {stable_mosaic.version = 11 : i64} {
  func.func @_soft_tree_kernel(%arg0: i32, %arg1: memref<8x32xbf16, #tpu.memory_space<vmem>>, %arg2: memref<32x128xbf16, #tpu.memory_space<vmem>>, %arg3: memref<1x128xf32, #tpu.memory_space<vmem>>, %arg4: memref<256x128xbf16, #tpu.memory_space<vmem>>, %arg5: memref<128x128xbf16, #tpu.memory_space<vmem>>, %arg6: memref<8x128xf32, #tpu.memory_space<vmem>>) attributes {dimension_semantics = [#tpu.dimension_semantics<parallel>], iteration_bounds = array<i64: 1>, scalar_prefetch = 0 : i64, scratch_operands = 0 : i64, tpu.core_type = #tpu.core_type<tc>, window_params = [{transform_indices = @transform_0, window_bounds = array<i64: 8, 32>}, {pipeline_mode = #tpu.pipeline_mode<synchronous>, transform_indices = @transform_1, window_bounds = array<i64: 32, 128>}, {pipeline_mode = #tpu.pipeline_mode<synchronous>, transform_indices = @transform_2, window_bounds = array<i64: 1, 128>}, {pipeline_mode = #tpu.pipeline_mode<synchronous>, transform_indices = @transform_3, window_bounds = array<i64: 256, 128>}, {pipeline_mode = #tpu.pipeline_mode<synchronous>, transform_indices = @transform_4, window_bounds = array<i64: 128, 128>}, {transform_indices = @transform_5, window_bounds = array<i64: 8, 128>}]} {
    %c0 = arith.constant 0 : index
    %c0_0 = arith.constant 0 : index
    %0 = vector.load %arg1[%c0, %c0_0] : memref<8x32xbf16, #tpu.memory_space<vmem>>, vector<8x32xbf16>
    %c0_1 = arith.constant 0 : index
    %c0_2 = arith.constant 0 : index
    %1 = vector.load %arg2[%c0_1, %c0_2] : memref<32x128xbf16, #tpu.memory_space<vmem>>, vector<32x128xbf16>
    %cst = arith.constant dense<0.000000e+00> : vector<8x128xf32>
    %2 = tpu.matmul %0, %1, %cst {dimension_numbers = #tpu.dot_dimension_numbers<[1], [0], [0], [1], [0, 0, 1, 1], [], []>} : vector<8x32xbf16>, vector<32x128xbf16>, vector<8x128xf32> -> vector<8x128xf32>
    %c0_3 = arith.constant 0 : index
    %c0_4 = arith.constant 0 : index
    %3 = vector.load %arg3[%c0_3, %c0_4] : memref<1x128xf32, #tpu.memory_space<vmem>>, vector<1x128xf32>
    %4 = vector.broadcast %3 : vector<1x128xf32> to vector<8x128xf32>
    %5 = arith.addf %2, %4 : vector<8x128xf32>
    %cst_5 = arith.constant 0.000000e+00 : f32
    %6 = vector.broadcast %cst_5 : f32 to vector<8x128xf32>
    %7 = arith.subf %6, %5 : vector<8x128xf32>
    %cst_6 = arith.constant 0.000000e+00 : f32
    %8 = vector.broadcast %cst_6 : f32 to vector<8x128xf32>
    %9 = arith.maximumf %7, %8 : vector<8x128xf32>
    %10 = math.absf %5 : vector<8x128xf32>
    %cst_7 = arith.constant 0.000000e+00 : f32
    %11 = vector.broadcast %cst_7 : f32 to vector<8x128xf32>
    %12 = arith.subf %11, %10 : vector<8x128xf32>
    %13 = math.exp %12 : vector<8x128xf32>
    %cst_8 = arith.constant 1.000000e+00 : f32
    %14 = vector.broadcast %cst_8 : f32 to vector<8x128xf32>
    %15 = arith.addf %14, %13 : vector<8x128xf32>
    %16 = math.log %15 : vector<8x128xf32>
    %17 = arith.addf %9, %16 : vector<8x128xf32>
    %cst_9 = arith.constant 0.000000e+00 : f32
    %18 = vector.broadcast %cst_9 : f32 to vector<8x128xf32>
    %19 = arith.subf %18, %17 : vector<8x128xf32>
    %20 = arith.subf %19, %5 : vector<8x128xf32>
    %21 = tpu.concatenate %19, %20 in 1 : vector<8x128xf32>, vector<8x128xf32> -> vector<8x256xf32>
    %22 = arith.truncf %21 : vector<8x256xf32> to vector<8x256xbf16>
    %c0_10 = arith.constant 0 : index
    %c0_11 = arith.constant 0 : index
    %23 = vector.load %arg4[%c0_10, %c0_11] : memref<256x128xbf16, #tpu.memory_space<vmem>>, vector<256x128xbf16>
    %cst_12 = arith.constant dense<0.000000e+00> : vector<8x128xf32>
    %24 = tpu.matmul %22, %23, %cst_12 {dimension_numbers = #tpu.dot_dimension_numbers<[1], [0], [0], [1], [0, 0, 1, 1], [], []>} : vector<8x256xbf16>, vector<256x128xbf16>, vector<8x128xf32> -> vector<8x128xf32>
    %25 = math.exp %24 : vector<8x128xf32>
    %26 = arith.truncf %25 : vector<8x128xf32> to vector<8x128xbf16>
    %c0_13 = arith.constant 0 : index
    %c0_14 = arith.constant 0 : index
    %27 = vector.load %arg5[%c0_13, %c0_14] : memref<128x128xbf16, #tpu.memory_space<vmem>>, vector<128x128xbf16>
    %cst_15 = arith.constant dense<0.000000e+00> : vector<8x128xf32>
    %28 = tpu.matmul %26, %27, %cst_15 {dimension_numbers = #tpu.dot_dimension_numbers<[1], [0], [0], [1], [0, 0, 1, 1], [], []>} : vector<8x128xbf16>, vector<128x128xbf16>, vector<8x128xf32> -> vector<8x128xf32>
    %c0_16 = arith.constant 0 : index
    %c0_17 = arith.constant 0 : index
    %29 = vector.load %arg6[%c0_16, %c0_17] : memref<8x128xf32, #tpu.memory_space<vmem>>, vector<8x128xf32>
    tpu.vector_store %arg6[%c0_16, %c0_17], %28 {strides = array<i32>} : memref<8x128xf32, #tpu.memory_space<vmem>>, vector<8x128xf32>,
    return
  }
  func.func @transform_0(%arg0: i32) -> (i32, i32) {
    %c0_i32 = arith.constant 0 : i32
    %c0_i32_0 = arith.constant 0 : i32
    return %arg0, %c0_i32 : i32, i32
  }
  func.func @transform_1(%arg0: i32) -> (i32, i32) {
    %c0_i32 = arith.constant 0 : i32
    %c0_i32_0 = arith.constant 0 : i32
    %c0_i32_1 = arith.constant 0 : i32
    return %c0_i32, %c0_i32_0 : i32, i32
  }
  func.func @transform_2(%arg0: i32) -> (i32, i32) {
    %c0_i32 = arith.constant 0 : i32
    %c0_i32_0 = arith.constant 0 : i32
    %c0_i32_1 = arith.constant 0 : i32
    return %c0_i32, %c0_i32_0 : i32, i32
  }
  func.func @transform_3(%arg0: i32) -> (i32, i32) {
    %c0_i32 = arith.constant 0 : i32
    %c0_i32_0 = arith.constant 0 : i32
    %c0_i32_1 = arith.constant 0 : i32
    return %c0_i32, %c0_i32_0 : i32, i32
  }
  func.func @transform_4(%arg0: i32) -> (i32, i32) {
    %c0_i32 = arith.constant 0 : i32
    %c0_i32_0 = arith.constant 0 : i32
    %c0_i32_1 = arith.constant 0 : i32
    return %c0_i32, %c0_i32_0 : i32, i32
  }
  func.func @transform_5(%arg0: i32) -> (i32, i32) {
    %c0_i32 = arith.constant 0 : i32
    %c0_i32_0 = arith.constant 0 : i32
    return %arg0, %c0_i32 : i32, i32
  }
}

module attributes {stable_mosaic.version = 11 : i64} {
  func.func @_soft_tree_kernel(%arg0: i32, %arg1: memref<8x32xbf16, #tpu.memory_space<vmem>>, %arg2: memref<32x128xbf16, #tpu.memory_space<vmem>>, %arg3: memref<1x128xf32, #tpu.memory_space<vmem>>, %arg4: memref<256x128xbf16, #tpu.memory_space<vmem>>, %arg5: memref<128x128xbf16, #tpu.memory_space<vmem>>, %arg6: memref<8x128xf32, #tpu.memory_space<vmem>>) attributes {dimension_semantics = [#tpu.dimension_semantics<parallel>], iteration_bounds = array<i64: 1>, scalar_prefetch = 0 : i64, scratch_operands = 0 : i64, tpu.core_type = #tpu.core_type<tc>, window_params = [{transform_indices = @transform_0, window_bounds = array<i64: 8, 32>}, {pipeline_mode = #tpu.pipeline_mode<synchronous>, transform_indices = @transform_1, window_bounds = array<i64: 32, 128>}, {pipeline_mode = #tpu.pipeline_mode<synchronous>, transform_indices = @transform_2, window_bounds = array<i64: 1, 128>}, {pipeline_mode = #tpu.pipeline_mode<synchronous>, transform_indices = @transform_3, window_bounds = array<i64: 256, 128>}, {pipeline_mode = #tpu.pipeline_mode<synchronous>, transform_indices = @transform_4, window_bounds = array<i64: 128, 128>}, {transform_indices = @transform_5, window_bounds = array<i64: 8, 128>}]} {
    %c0 = arith.constant 0 : index
    %c0_0 = arith.constant 0 : index
    %0 = vector.load %arg1[%c0, %c0_0] : memref<8x32xbf16, #tpu.memory_space<vmem>>, vector<8x32xbf16>
    %c0_1 = arith.constant 0 : index
    %c0_2 = arith.constant 0 : index
    %1 = vector.load %arg2[%c0_1, %c0_2] : memref<32x128xbf16, #tpu.memory_space<vmem>>, vector<32x128xbf16>
    %cst = arith.constant dense<0.000000e+00> : vector<8x128xf32>
    %2 = tpu.matmul %0, %1, %cst {dimension_numbers = #tpu.dot_dimension_numbers<[1], [0], [0], [1], [0, 0, 1, 1], [], []>} : vector<8x32xbf16>, vector<32x128xbf16>, vector<8x128xf32> -> vector<8x128xf32>
    %c0_3 = arith.constant 0 : index
    %c0_4 = arith.constant 0 : index
    %3 = vector.load %arg3[%c0_3, %c0_4] : memref<1x128xf32, #tpu.memory_space<vmem>>, vector<1x128xf32>
    %4 = vector.broadcast %3 : vector<1x128xf32> to vector<8x128xf32>
    %5 = arith.addf %2, %4 : vector<8x128xf32>
    %cst_5 = arith.constant 0.000000e+00 : f32
    %6 = vector.broadcast %cst_5 : f32 to vector<8x128xf32>
    %7 = arith.subf %6, %5 : vector<8x128xf32>
    %cst_6 = arith.constant 0.000000e+00 : f32
    %8 = vector.broadcast %cst_6 : f32 to vector<8x128xf32>
    %9 = arith.maximumf %7, %8 : vector<8x128xf32>
    %10 = math.absf %5 : vector<8x128xf32>
    %cst_7 = arith.constant 0.000000e+00 : f32
    %11 = vector.broadcast %cst_7 : f32 to vector<8x128xf32>
    %12 = arith.subf %11, %10 : vector<8x128xf32>
    %13 = math.exp %12 : vector<8x128xf32>
    %cst_8 = arith.constant 1.000000e+00 : f32
    %14 = vector.broadcast %cst_8 : f32 to vector<8x128xf32>
    %15 = arith.addf %14, %13 : vector<8x128xf32>
    %16 = math.log %15 : vector<8x128xf32>
    %17 = arith.addf %9, %16 : vector<8x128xf32>
    %cst_9 = arith.constant 0.000000e+00 : f32
    %18 = vector.broadcast %cst_9 : f32 to vector<8x128xf32>
    %19 = arith.subf %18, %17 : vector<8x128xf32>
    %20 = arith.subf %19, %5 : vector<8x128xf32>
    %21 = tpu.concatenate %19, %20 in 1 : vector<8x128xf32>, vector<8x128xf32> -> vector<8x256xf32>
    %22 = arith.truncf %21 : vector<8x256xf32> to vector<8x256xbf16>
    %c0_10 = arith.constant 0 : index
    %c0_11 = arith.constant 0 : index
    %23 = vector.load %arg4[%c0_10, %c0_11] : memref<256x128xbf16, #tpu.memory_space<vmem>>, vector<256x128xbf16>
    %cst_12 = arith.constant dense<0.000000e+00> : vector<8x128xf32>
    %24 = tpu.matmul %22, %23, %cst_12 {dimension_numbers = #tpu.dot_dimension_numbers<[1], [0], [0], [1], [0, 0, 1, 1], [], []>} : vector<8x256xbf16>, vector<256x128xbf16>, vector<8x128xf32> -> vector<8x128xf32>
    %25 = math.exp %24 : vector<8x128xf32>
    %26 = arith.truncf %25 : vector<8x128xf32> to vector<8x128xbf16>
    %c0_13 = arith.constant 0 : index
    %c0_14 = arith.constant 0 : index
    %27 = vector.load %arg5[%c0_13, %c0_14] : memref<128x128xbf16, #tpu.memory_space<vmem>>, vector<128x128xbf16>
    %cst_15 = arith.constant dense<0.000000e+00> : vector<8x128xf32>
    %28 = tpu.matmul %26, %27, %cst_15 {dimension_numbers = #tpu.dot_dimension_numbers<[1], [0], [0], [1], [0, 0, 1, 1], [], []>} : vector<8x128xbf16>, vector<128x128xbf16>, vector<8x128xf32> -> vector<8x128xf32>
    %c0_16 = arith.constant 0 : index
    %c0_17 = arith.constant 0 : index
    %29 = vector.load %arg6[%c0_16, %c0_17] : memref<8x128xf32, #tpu.memory_space<vmem>>, vector<8x128xf32>
    tpu.vector_store %arg6[%c0_16, %c0_17], %28 {strides = array<i32>} : memref<8x128xf32, #tpu.memory_space<vmem>>, vector<8x128xf32>,
    return
  }
  func.func @transform_0(%arg0: i32) -> (i32, i32) {
    %c0_i32 = arith.constant 0 : i32
    %c0_i32_0 = arith.constant 0 : i32
    return %arg0, %c0_i32 : i32, i32
  }
  func.func @transform_1(%arg0: i32) -> (i32, i32) {
    %c0_i32 = arith.constant 0 : i32
    %c0_i32_0 = arith.constant 0 : i32
    %c0_i32_1 = arith.constant 0 : i32
    return %c0_i32, %c0_i32_0 : i32, i32
  }
  func.func @transform_2(%arg0: i32) -> (i32, i32) {
    %c0_i32 = arith.constant 0 : i32
    %c0_i32_0 = arith.constant 0 : i32
    %c0_i32_1 = arith.constant 0 : i32
    return %c0_i32, %c0_i32_0 : i32, i32
  }
  func.func @transform_3(%arg0: i32) -> (i32, i32) {
    %c0_i32 = arith.constant 0 : i32
    %c0_i32_0 = arith.constant 0 : i32
    %c0_i32_1 = arith.constant 0 : i32
    return %c0_i32, %c0_i32_0 : i32, i32
  }
  func.func @transform_4(%arg0: i32) -> (i32, i32) {
    %c0_i32 = arith.constant 0 : i32
    %c0_i32_0 = arith.constant 0 : i32
    %c0_i32_1 = arith.constant 0 : i32
    return %c0_i32, %c0_i32_0 : i32, i32
  }
  func.func @transform_5(%arg0: i32) -> (i32, i32) {
    %c0_i32 = arith.constant 0 : i32
    %c0_i32_0 = arith.constant 0 : i32
    return %arg0, %c0_i32 : i32, i32
  }
}

</mosaic_0001>

<llo_original>
// kernel: tpu_custom_call.1
$region0: #{tpu_custom_call.1}
  #allocation0 [shape = 'u32[]', space=smem, size = 0x4, offset = 0x4, fixed_abs, tag = 'smem constant byte address 0x4 - core index']
  #allocation1 [shape = 'u32[72,128]{1,0:T(1,128)}', space=vmem, size = 0x9000, scoped, tag = 'internal scratch']
  %s0 = inlined_call_operand.hbm [shape: bf16[8,32], index: 0, kind: input, shape index: {}]
  %s1 = inlined_call_operand.hbm [shape: bf16[32,128], index: 1, kind: input, shape index: {}]
  %s2 = inlined_call_operand.vmem [shape: f32[1,128], index: 2, kind: input, shape index: {}]
  %s3 = inlined_call_operand.hbm [shape: bf16[256,128], index: 3, kind: input, shape index: {}]
  %s4 = inlined_call_operand.hbm [shape: bf16[128,128], index: 4, kind: input, shape index: {}]
  %s5 = inlined_call_operand.hbm [shape: f32[8,128], index: 5, kind: output, shape index: {}]
  %s6 = sld [smem:[#allocation0]]
  $region46: #{tpu_custom_call.1} parent=0
    _
  %s8 = ssub.s32 1, %s6
  %s9 = scalar_select 0, %s8, %s6
  $region1: #{tpu_custom_call.1} parent=0
    #allocation2 [shape = 'u8[2048]{0}', space=vmem, size = 0x800, scoped, tag = 'input window, operand 0, single buffered']
    #allocation3 [shape = 's32[1]{0}', space=sflag, size = 0x4, scoped, tag = 'scoped memory for tpu_custom_call.1']
    #allocation4 [shape = 's32[1]{0}', space=sflag, size = 0x4, scoped, tag = 'scoped memory for tpu_custom_call.1']
    #allocation5 [shape = 'u8[8192]{0}', space=vmem, size = 0x2000, scoped, tag = 'input window, operand 1, single buffered']
    #allocation6 [shape = 's32[1]{0}', space=sflag, size = 0x4, scoped, tag = 'scoped memory for tpu_custom_call.1']
    #allocation7 [shape = 'u8[65536]{0}', space=vmem, size = 0x10000, scoped, tag = 'input window, operand 3, single buffered']
    #allocation8 [shape = 'u8[32768]{0}', space=vmem, size = 0x8000, scoped, tag = 'input window, operand 4, single buffered']
    #allocation9 [shape = 's32[1]{0}', space=sflag, size = 0x4, scoped, tag = 'scoped memory for tpu_custom_call.1']
    #allocation10 [shape = 'u8[4096]{0}', space=vmem, size = 0x1000, scoped, tag = 'output window, operand 0, single buffered']
    %10 = vsyncpa [#allocation3], 0
    %11 = vsyncpa [#allocation6], 0
    %12 = vsyncpa [#allocation9], 0
    %13 = vsyncpa [#allocation4], 0
    // Predicated region
    $region2: #{tpu_custom_call.1} parent=1 // pred_check
      _
    $region3: #{tpu_custom_call.1} parent=1 // pred_check_branch
      %15 = sbr.rel (0) target = $region5
    $region4: #{tpu_custom_call.1} parent=1 // pred_region
      %17 = vsyncadd [#allocation3], 0
      %s19 = sshll.u32 %s0, 4
      %s20 = int_to_ptr.hbm [resolvable:$true] %s19
      %s21 = sshll.u32 [#allocation2], 4
      %s22 = int_to_ptr.vmem [resolvable:$true] %s21
      %24 = dma.hbm_to_vmem [thread:$0]  %s20, 64, %s22, [#allocation3]
    $region5: #{tpu_custom_call.1} parent=1 // pred_fallthru
      _
    // Predicated region
    $region6: #{tpu_custom_call.1} parent=1 // pred_check
      _
    $region7: #{tpu_custom_call.1} parent=1 // pred_check_branch
      %26 = sbr.rel (0) target = $region9
    $region8: #{tpu_custom_call.1} parent=1 // pred_region
      %28 = vsyncadd [#allocation6], 0
      %s29 = sshll.u32 %s1, 4
      %s30 = int_to_ptr.hbm [resolvable:$true] %s29
      %s31 = sshll.u32 [#allocation5], 4
      %s32 = int_to_ptr.vmem [resolvable:$true] %s31
      %37 = dma.hbm_to_vmem [thread:$0]  %s30, 256, %s32, [#allocation6], 64, 64, 4
    $region9: #{tpu_custom_call.1} parent=1 // pred_fallthru
      _
    // Predicated region
    $region10: #{tpu_custom_call.1} parent=1 // pred_check
      _
    $region11: #{tpu_custom_call.1} parent=1 // pred_check_branch
      %39 = sbr.rel (0) target = $region13
    $region12: #{tpu_custom_call.1} parent=1 // pred_region
      _
    $region13: #{tpu_custom_call.1} parent=1 // pred_fallthru
      _
    // Predicated region
    $region14: #{tpu_custom_call.1} parent=1 // pred_check
      _
    $region15: #{tpu_custom_call.1} parent=1 // pred_check_branch
      %41 = sbr.rel (0) target = $region17
    $region16: #{tpu_custom_call.1} parent=1 // pred_region
      %43 = vsyncadd [#allocation6], 0
      %s44 = sshll.u32 %s3, 4
      %s45 = int_to_ptr.hbm [resolvable:$true] %s44
      %s46 = sshll.u32 [#allocation7], 4
      %s47 = int_to_ptr.vmem [resolvable:$true] %s46
      %52 = dma.hbm_to_vmem [thread:$0]  %s45, 2048, %s47, [#allocation6], 64, 64, 4
    $region17: #{tpu_custom_call.1} parent=1 // pred_fallthru
      _
    // Predicated region
    $region18: #{tpu_custom_call.1} parent=1 // pred_check
      _
    $region19: #{tpu_custom_call.1} parent=1 // pred_check_branch
      %54 = sbr.rel (0) target = $region21
    $region20: #{tpu_custom_call.1} parent=1 // pred_region
      %56 = vsyncadd [#allocation9], 0
      %s57 = sshll.u32 %s4, 4
      %s58 = int_to_ptr.hbm [resolvable:$true] %s57
      %s59 = sshll.u32 [#allocation8], 4
      %s60 = int_to_ptr.vmem [resolvable:$true] %s59
      %65 = dma.hbm_to_vmem [thread:$0]  %s58, 1024, %s60, [#allocation9], 64, 64, 4
    $region21: #{tpu_custom_call.1} parent=1 // pred_fallthru
      _
    // Predicated region
    $region22: #{tpu_custom_call.1} parent=1 // pred_check
      _
    $region23: #{tpu_custom_call.1} parent=1 // pred_check_branch
      %67 = sbr.rel (0) target = $region25
    $region24: #{tpu_custom_call.1} parent=1 // pred_region
      %69 = dma.done [#allocation3], 64
    $region25: #{tpu_custom_call.1} parent=1 // pred_fallthru
      _
    // Predicated region
    $region26: #{tpu_custom_call.1} parent=1 // pred_check
      _
    $region27: #{tpu_custom_call.1} parent=1 // pred_check_branch
      %71 = sbr.rel (0) target = $region29
    $region28: #{tpu_custom_call.1} parent=1 // pred_region
      %73 = dma.done [#allocation6], 256
    $region29: #{tpu_custom_call.1} parent=1 // pred_fallthru
      _
    // Predicated region
    $region30: #{tpu_custom_call.1} parent=1 // pred_check
      _
    $region31: #{tpu_custom_call.1} parent=1 // pred_check_branch
      %75 = sbr.rel (0) target = $region33
    $region32: #{tpu_custom_call.1} parent=1 // pred_region
      %77 = dma.done [#allocation6], 2048
    $region33: #{tpu_custom_call.1} parent=1 // pred_fallthru
      _
    // Predicated region
    $region34: #{tpu_custom_call.1} parent=1 // pred_check
      _
    $region35: #{tpu_custom_call.1} parent=1 // pred_check_branch
      %79 = sbr.rel (0) target = $region37
    $region36: #{tpu_custom_call.1} parent=1 // pred_region
      %81 = dma.done [#allocation9], 1024
    $region37: #{tpu_custom_call.1} parent=1 // pred_fallthru
      _
    %v83 = vld [vmem:[#allocation2] sm:$0xf]
    %v84 = vld [vmem:[#allocation5] sm:$0xf]
    %v85 = vld [vmem:[#allocation5 + $0x4] sm:$0xf]
    %v86 = vld [vmem:[#allocation5 + $0x8] sm:$0xf]
    %v87 = vld [vmem:[#allocation5 + $0xc] sm:$0xf]
    %v88 = vld [vmem:[%s2] sm:$0x1]
    %v90 = vperm.slane %v88, 0
    %v96 = vunpack.c.l.b16 %v84
    %v97 = vunpack.c.l.b16 %v85
    %v98 = vunpack.c.l.b16 %v86
    %v99 = vunpack.c.l.b16 %v87
    %v100 = vpack.c.b16 %v97, %v96
    %v101 = vpack.c.b16 %v99, %v98
    %vm104 = vcmask 261120
    %v106 = vsel %vm104, %v83, 0
    %108 = vmatpush.bf16.msra.mxu0 0
    %109 = vmatpush.bf16.msra.mxu0 0
    %110 = vmatpush.bf16.msra.mxu0 0
    %111 = vmatpush.bf16.msra.mxu0 0
    %112 = vmatpush.bf16.msra.mxu0 0
    %113 = vmatpush.bf16.msra.mxu0 0
    %114 = vmatpush.bf16.msra.mxu0 %v101
    %115 = vmatpush.bf16.msra.mxu0 %v100
    %116 = vmatmul.bf16.gmra.mxu0 %v106
    %v117 = vpop.f32.mrf.mxu0
    %v118 = vadd.f32 %v90, %v117
    %v119 = vpop.f32.mrf.mxu0
    %120 = vdwg.mxu0
    %v121 = vsub.f32 0.0, %v118
    %v122 = vmax.f32 %v121, 0.0
    %v123 = vand.u32 2147483647, %v118
    %v124 = vsub.f32 0.0, %v123
    %v125 = vmul.f32 %v124, 1.442695
    %v126 = vpow.pop %v125
    %v127 = vadd.f32 %v126, 1.0
    %v128 = vlog2.pop %v127
    %v129 = vmul.f32 %v128, 0.6931472
    %v130 = vadd.f32 %v122, %v129
    %v131 = vsub.f32 0.0, %v130
    %v132 = vsub.f32 %v131, %v118
    %v133 = vpack.c.bf16 %v131, %v131
    %v134 = vpack.c.bf16 %v132, %v132
    %v135 = vld [vmem:[#allocation7] sm:$0xf]
    %v136 = vld [vmem:[#allocation7 + $0x4] sm:$0xf]
    %v137 = vld [vmem:[#allocation7 + $0x8] sm:$0xf]
    %v138 = vld [vmem:[#allocation7 + $0xc] sm:$0xf]
    %v139 = vld [vmem:[#allocation7 + $0x10] sm:$0xf]
    %v140 = vld [vmem:[#allocation7 + $0x14] sm:$0xf]
    %v141 = vld [vmem:[#allocation7 + $0x18] sm:$0xf]
    %v142 = vld [vmem:[#allocation7 + $0x1c] sm:$0xf]
    %v143 = vld [vmem:[#allocation7 + $0x20] sm:$0xf]
    %v144 = vld [vmem:[#allocation7 + $0x24] sm:$0xf]
    %v145 = vld [vmem:[#allocation7 + $0x28] sm:$0xf]
    %v146 = vld [vmem:[#allocation7 + $0x2c] sm:$0xf]
    %v147 = vld [vmem:[#allocation7 + $0x30] sm:$0xf]
    %v148 = vld [vmem:[#allocation7 + $0x34] sm:$0xf]
    %v149 = vld [vmem:[#allocation7 + $0x38] sm:$0xf]
    %v150 = vld [vmem:[#allocation7 + $0x3c] sm:$0xf]
    %v151 = vld [vmem:[#allocation7 + $0x40] sm:$0xf]
    %v152 = vld [vmem:[#allocation7 + $0x44] sm:$0xf]
    %v153 = vld [vmem:[#allocation7 + $0x48] sm:$0xf]
    %v154 = vld [vmem:[#allocation7 + $0x4c] sm:$0xf]
    %v155 = vld [vmem:[#allocation7 + $0x50] sm:$0xf]
    %v156 = vld [vmem:[#allocation7 + $0x54] sm:$0xf]
    %v157 = vld [vmem:[#allocation7 + $0x58] sm:$0xf]
    %v158 = vld [vmem:[#allocation7 + $0x5c] sm:$0xf]
    %v159 = vld [vmem:[#allocation7 + $0x60] sm:$0xf]
    %v160 = vld [vmem:[#allocation7 + $0x64] sm:$0xf]
    %v161 = vld [vmem:[#allocation7 + $0x68] sm:$0xf]
    %v162 = vld [vmem:[#allocation7 + $0x6c] sm:$0xf]
    %v163 = vld [vmem:[#allocation7 + $0x70] sm:$0xf]
    %v164 = vld [vmem:[#allocation7 + $0x74] sm:$0xf]
    %v165 = vld [vmem:[#allocation7 + $0x78] sm:$0xf]
    %v166 = vld [vmem:[#allocation7 + $0x7c] sm:$0xf]
    %v199 = vunpack.c.l.b16 %v135
    %v200 = vunpack.c.l.b16 %v136
    %v201 = vunpack.c.l.b16 %v137
    %v202 = vunpack.c.l.b16 %v138
    %v203 = vunpack.c.l.b16 %v139
    %v204 = vunpack.c.l.b16 %v140
    %v205 = vunpack.c.l.b16 %v141
    %v206 = vunpack.c.l.b16 %v142
    %v207 = vunpack.c.l.b16 %v143
    %v208 = vunpack.c.l.b16 %v144
    %v209 = vunpack.c.l.b16 %v145
    %v210 = vunpack.c.l.b16 %v146
    %v211 = vunpack.c.l.b16 %v147
    %v212 = vunpack.c.l.b16 %v148
    %v213 = vunpack.c.l.b16 %v149
    %v214 = vunpack.c.l.b16 %v150
    %v215 = vunpack.c.l.b16 %v151
    %v216 = vunpack.c.l.b16 %v152
    %v217 = vunpack.c.l.b16 %v153
    %v218 = vunpack.c.l.b16 %v154
    %v219 = vunpack.c.l.b16 %v155
    %v220 = vunpack.c.l.b16 %v156
    %v221 = vunpack.c.l.b16 %v157
    %v222 = vunpack.c.l.b16 %v158
    %v223 = vunpack.c.l.b16 %v159
    %v224 = vunpack.c.l.b16 %v160
    %v225 = vunpack.c.l.b16 %v161
    %v226 = vunpack.c.l.b16 %v162
    %v227 = vunpack.c.l.b16 %v163
    %v228 = vunpack.c.l.b16 %v164
    %v229 = vunpack.c.l.b16 %v165
    %v230 = vunpack.c.l.b16 %v166
    %v231 = vpack.c.b16 %v200, %v199
    %v232 = vpack.c.b16 %v202, %v201
    %v233 = vpack.c.b16 %v204, %v203
    %v234 = vpack.c.b16 %v206, %v205
    %v235 = vpack.c.b16 %v208, %v207
    %v236 = vpack.c.b16 %v210, %v209
    %v237 = vpack.c.b16 %v212, %v211
    %v238 = vpack.c.b16 %v214, %v213
    %v239 = vpack.c.b16 %v216, %v215
    %v240 = vpack.c.b16 %v218, %v217
    %v241 = vpack.c.b16 %v220, %v219
    %v242 = vpack.c.b16 %v222, %v221
    %v243 = vpack.c.b16 %v224, %v223
    %v244 = vpack.c.b16 %v226, %v225
    %v245 = vpack.c.b16 %v228, %v227
    %v246 = vpack.c.b16 %v230, %v229
    %263 = vmatpush.bf16.msra.mxu0 %v238
    %264 = vmatpush.bf16.msra.mxu0 %v237
    %265 = vmatpush.bf16.msra.mxu0 %v236
    %266 = vmatpush.bf16.msra.mxu0 %v235
    %267 = vmatpush.bf16.msra.mxu0 %v234
    %268 = vmatpush.bf16.msra.mxu0 %v233
    %269 = vmatpush.bf16.msra.mxu0 %v232
    %270 = vmatpush.bf16.msra.mxu0 %v231
    %271 = vmatmul.bf16.gmra.mxu0 %v133
    %v272 = vpop.f32.mrf.mxu0
    %v273 = vadd.f32 0.0, %v272
    %v274 = vpop.f32.mrf.mxu0
    %275 = vdwg.mxu0
    %276 = vmatpush.bf16.msra.mxu0 %v246
    %277 = vmatpush.bf16.msra.mxu0 %v245
    %278 = vmatpush.bf16.msra.mxu0 %v244
    %279 = vmatpush.bf16.msra.mxu0 %v243
    %280 = vmatpush.bf16.msra.mxu0 %v242
    %281 = vmatpush.bf16.msra.mxu0 %v241
    %282 = vmatpush.bf16.msra.mxu0 %v240
    %283 = vmatpush.bf16.msra.mxu0 %v239
    %284 = vmatmul.bf16.gmra.mxu0 %v134
    %v285 = vpop.f32.mrf.mxu0
    %v286 = vadd.f32 %v273, %v285
    %v287 = vpop.f32.mrf.mxu0
    %288 = vdwg.mxu0
    %v289 = vmul.f32 %v286, 1.442695
    %v290 = vpow.pop %v289
    %v291 = vpack.c.bf16 %v290, %v290
    %v292 = vld [vmem:[#allocation8] sm:$0xf]
    %v293 = vld [vmem:[#allocation8 + $0x4] sm:$0xf]
    %v294 = vld [vmem:[#allocation8 + $0x8] sm:$0xf]
    %v295 = vld [vmem:[#allocation8 + $0xc] sm:$0xf]
    %v296 = vld [vmem:[#allocation8 + $0x10] sm:$0xf]
    %v297 = vld [vmem:[#allocation8 + $0x14] sm:$0xf]
    %v298 = vld [vmem:[#allocation8 + $0x18] sm:$0xf]
    %v299 = vld [vmem:[#allocation8 + $0x1c] sm:$0xf]
    %v300 = vld [vmem:[#allocation8 + $0x20] sm:$0xf]
    %v301 = vld [vmem:[#allocation8 + $0x24] sm:$0xf]
    %v302 = vld [vmem:[#allocation8 + $0x28] sm:$0xf]
    %v303 = vld [vmem:[#allocation8 + $0x2c] sm:$0xf]
    %v304 = vld [vmem:[#allocation8 + $0x30] sm:$0xf]
    %v305 = vld [vmem:[#allocation8 + $0x34] sm:$0xf]
    %v306 = vld [vmem:[#allocation8 + $0x38] sm:$0xf]
    %v307 = vld [vmem:[#allocation8 + $0x3c] sm:$0xf]
    %v324 = vunpack.c.l.b16 %v292
    %v325 = vunpack.c.l.b16 %v293
    %v326 = vunpack.c.l.b16 %v294
    %v327 = vunpack.c.l.b16 %v295
    %v328 = vunpack.c.l.b16 %v296
    %v329 = vunpack.c.l.b16 %v297
    %v330 = vunpack.c.l.b16 %v298
    %v331 = vunpack.c.l.b16 %v299
    %v332 = vunpack.c.l.b16 %v300
    %v333 = vunpack.c.l.b16 %v301
    %v334 = vunpack.c.l.b16 %v302
    %v335 = vunpack.c.l.b16 %v303
    %v336 = vunpack.c.l.b16 %v304
    %v337 = vunpack.c.l.b16 %v305
    %v338 = vunpack.c.l.b16 %v306
    %v339 = vunpack.c.l.b16 %v307
    %v340 = vpack.c.b16 %v325, %v324
    %v341 = vpack.c.b16 %v327, %v326
    %v342 = vpack.c.b16 %v329, %v328
    %v343 = vpack.c.b16 %v331, %v330
    %v344 = vpack.c.b16 %v333, %v332
    %v345 = vpack.c.b16 %v335, %v334
    %v346 = vpack.c.b16 %v337, %v336
    %v347 = vpack.c.b16 %v339, %v338
    %356 = vmatpush.bf16.msra.mxu0 %v347
    %357 = vmatpush.bf16.msra.mxu0 %v346
    %358 = vmatpush.bf16.msra.mxu0 %v345
    %359 = vmatpush.bf16.msra.mxu0 %v344
    %360 = vmatpush.bf16.msra.mxu0 %v343
    %361 = vmatpush.bf16.msra.mxu0 %v342
    %362 = vmatpush.bf16.msra.mxu0 %v341
    %363 = vmatpush.bf16.msra.mxu0 %v340
    %364 = vmatmul.bf16.gmra.mxu0 %v291
    %v365 = vpop.f32.mrf.mxu0
    %v366 = vadd.f32 0.0, %v365
    %v367 = vpop.f32.mrf.mxu0
    %368 = vdwg.mxu0
    %369 = vst [vmem:[#allocation10] sm:$0xff] %v366
    // Predicated region
    $region38: #{tpu_custom_call.1} parent=1 // pred_check
      _
    $region39: #{tpu_custom_call.1} parent=1 // pred_check_branch
      %371 = sbr.rel (0) target = $region41
    $region40: #{tpu_custom_call.1} parent=1 // pred_region
      %373 = vsyncadd [#allocation4], 0
      %s375 = sshll.u32 [#allocation10], 4
      %s376 = int_to_ptr.vmem [resolvable:$true] %s375
      %s377 = sshll.u32 %s5, 4
      %s378 = int_to_ptr.hbm [resolvable:$true] %s377
      %380 = dma.vmem_to_hbm [thread:$0]  %s376, 128, %s378, [#allocation4]
    $region41: #{tpu_custom_call.1} parent=1 // pred_fallthru
      _
    // Predicated region
    $region42: #{tpu_custom_call.1} parent=1 // pred_check
      _
    $region43: #{tpu_custom_call.1} parent=1 // pred_check_branch
      %382 = sbr.rel (0) target = $region45
    $region44: #{tpu_custom_call.1} parent=1 // pred_region
      %384 = dma.done [#allocation4], 128
    $region45: #{tpu_custom_call.1} parent=1 // pred_fallthru
      _
    %385 = vsyncpa [#allocation3], 1
    %386 = vsyncpa [#allocation6], 1
    %387 = vsyncpa [#allocation9], 1
    %388 = vsyncpa [#allocation4], 1

// kernel: tpu_custom_call.1
$region0: #{tpu_custom_call.1}
  #allocation0 [shape = 'u32[]', space=smem, size = 0x4, offset = 0x4, fixed_abs, tag = 'smem constant byte address 0x4 - core index']
  #allocation1 [shape = 'u32[72,128]{1,0:T(1,128)}', space=vmem, size = 0x9000, scoped, tag = 'internal scratch']
  %s0 = inlined_call_operand.hbm [shape: bf16[8,32], index: 0, kind: input, shape index: {}]
  %s1 = inlined_call_operand.hbm [shape: bf16[32,128], index: 1, kind: input, shape index: {}]
  %s2 = inlined_call_operand.vmem [shape: f32[1,128], index: 2, kind: input, shape index: {}]
  %s3 = inlined_call_operand.hbm [shape: bf16[256,128], index: 3, kind: input, shape index: {}]
  %s4 = inlined_call_operand.hbm [shape: bf16[128,128], index: 4, kind: input, shape index: {}]
  %s5 = inlined_call_operand.hbm [shape: f32[8,128], index: 5, kind: output, shape index: {}]
  %s6 = sld [smem:[#allocation0]]
  $region46: #{tpu_custom_call.1} parent=0
    _
  %s8 = ssub.s32 1, %s6
  %s9 = scalar_select 0, %s8, %s6
  $region1: #{tpu_custom_call.1} parent=0
    #allocation2 [shape = 'u8[2048]{0}', space=vmem, size = 0x800, scoped, tag = 'input window, operand 0, single buffered']
    #allocation3 [shape = 's32[1]{0}', space=sflag, size = 0x4, scoped, tag = 'scoped memory for tpu_custom_call.1']
    #allocation4 [shape = 's32[1]{0}', space=sflag, size = 0x4, scoped, tag = 'scoped memory for tpu_custom_call.1']
    #allocation5 [shape = 'u8[8192]{0}', space=vmem, size = 0x2000, scoped, tag = 'input window, operand 1, single buffered']
    #allocation6 [shape = 's32[1]{0}', space=sflag, size = 0x4, scoped, tag = 'scoped memory for tpu_custom_call.1']
    #allocation7 [shape = 'u8[65536]{0}', space=vmem, size = 0x10000, scoped, tag = 'input window, operand 3, single buffered']
    #allocation8 [shape = 'u8[32768]{0}', space=vmem, size = 0x8000, scoped, tag = 'input window, operand 4, single buffered']
    #allocation9 [shape = 's32[1]{0}', space=sflag, size = 0x4, scoped, tag = 'scoped memory for tpu_custom_call.1']
    #allocation10 [shape = 'u8[4096]{0}', space=vmem, size = 0x1000, scoped, tag = 'output window, operand 0, single buffered']
    %10 = vsyncpa [#allocation3], 0
    %11 = vsyncpa [#allocation6], 0
    %12 = vsyncpa [#allocation9], 0
    %13 = vsyncpa [#allocation4], 0
    // Predicated region
    $region2: #{tpu_custom_call.1} parent=1 // pred_check
      _
    $region3: #{tpu_custom_call.1} parent=1 // pred_check_branch
      %15 = sbr.rel (0) target = $region5
    $region4: #{tpu_custom_call.1} parent=1 // pred_region
      %17 = vsyncadd [#allocation3], 0
      %s19 = sshll.u32 %s0, 4
      %s20 = int_to_ptr.hbm [resolvable:$true] %s19
      %s21 = sshll.u32 [#allocation2], 4
      %s22 = int_to_ptr.vmem [resolvable:$true] %s21
      %24 = dma.hbm_to_vmem [thread:$0]  %s20, 64, %s22, [#allocation3]
    $region5: #{tpu_custom_call.1} parent=1 // pred_fallthru
      _
    // Predicated region
    $region6: #{tpu_custom_call.1} parent=1 // pred_check
      _
    $region7: #{tpu_custom_call.1} parent=1 // pred_check_branch
      %26 = sbr.rel (0) target = $region9
    $region8: #{tpu_custom_call.1} parent=1 // pred_region
      %28 = vsyncadd [#allocation6], 0
      %s29 = sshll.u32 %s1, 4
      %s30 = int_to_ptr.hbm [resolvable:$true] %s29
      %s31 = sshll.u32 [#allocation5], 4
      %s32 = int_to_ptr.vmem [resolvable:$true] %s31
      %37 = dma.hbm_to_vmem [thread:$0]  %s30, 256, %s32, [#allocation6], 64, 64, 4
    $region9: #{tpu_custom_call.1} parent=1 // pred_fallthru
      _
    // Predicated region
    $region10: #{tpu_custom_call.1} parent=1 // pred_check
      _
    $region11: #{tpu_custom_call.1} parent=1 // pred_check_branch
      %39 = sbr.rel (0) target = $region13
    $region12: #{tpu_custom_call.1} parent=1 // pred_region
      _
    $region13: #{tpu_custom_call.1} parent=1 // pred_fallthru
      _
    // Predicated region
    $region14: #{tpu_custom_call.1} parent=1 // pred_check
      _
    $region15: #{tpu_custom_call.1} parent=1 // pred_check_branch
      %41 = sbr.rel (0) target = $region17
    $region16: #{tpu_custom_call.1} parent=1 // pred_region
      %43 = vsyncadd [#allocation6], 0
      %s44 = sshll.u32 %s3, 4
      %s45 = int_to_ptr.hbm [resolvable:$true] %s44
      %s46 = sshll.u32 [#allocation7], 4
      %s47 = int_to_ptr.vmem [resolvable:$true] %s46
      %52 = dma.hbm_to_vmem [thread:$0]  %s45, 2048, %s47, [#allocation6], 64, 64, 4
    $region17: #{tpu_custom_call.1} parent=1 // pred_fallthru
      _
    // Predicated region
    $region18: #{tpu_custom_call.1} parent=1 // pred_check
      _
    $region19: #{tpu_custom_call.1} parent=1 // pred_check_branch
      %54 = sbr.rel (0) target = $region21
    $region20: #{tpu_custom_call.1} parent=1 // pred_region
      %56 = vsyncadd [#allocation9], 0
      %s57 = sshll.u32 %s4, 4
      %s58 = int_to_ptr.hbm [resolvable:$true] %s57
      %s59 = sshll.u32 [#allocation8], 4
      %s60 = int_to_ptr.vmem [resolvable:$true] %s59
      %65 = dma.hbm_to_vmem [thread:$0]  %s58, 1024, %s60, [#allocation9], 64, 64, 4
    $region21: #{tpu_custom_call.1} parent=1 // pred_fallthru
      _
    // Predicated region
    $region22: #{tpu_custom_call.1} parent=1 // pred_check
      _
    $region23: #{tpu_custom_call.1} parent=1 // pred_check_branch
      %67 = sbr.rel (0) target = $region25
    $region24: #{tpu_custom_call.1} parent=1 // pred_region
      %69 = dma.done [#allocation3], 64
    $region25: #{tpu_custom_call.1} parent=1 // pred_fallthru
      _
    // Predicated region
    $region26: #{tpu_custom_call.1} parent=1 // pred_check
      _
    $region27: #{tpu_custom_call.1} parent=1 // pred_check_branch
      %71 = sbr.rel (0) target = $region29
    $region28: #{tpu_custom_call.1} parent=1 // pred_region
      %73 = dma.done [#allocation6], 256
    $region29: #{tpu_custom_call.1} parent=1 // pred_fallthru
      _
    // Predicated region
    $region30: #{tpu_custom_call.1} parent=1 // pred_check
      _
    $region31: #{tpu_custom_call.1} parent=1 // pred_check_branch
      %75 = sbr.rel (0) target = $region33
    $region32: #{tpu_custom_call.1} parent=1 // pred_region
      %77 = dma.done [#allocation6], 2048
    $region33: #{tpu_custom_call.1} parent=1 // pred_fallthru
      _
    // Predicated region
    $region34: #{tpu_custom_call.1} parent=1 // pred_check
      _
    $region35: #{tpu_custom_call.1} parent=1 // pred_check_branch
      %79 = sbr.rel (0) target = $region37
    $region36: #{tpu_custom_call.1} parent=1 // pred_region
      %81 = dma.done [#allocation9], 1024
    $region37: #{tpu_custom_call.1} parent=1 // pred_fallthru
      _
    %v83 = vld [vmem:[#allocation2] sm:$0xf]
    %v84 = vld [vmem:[#allocation5] sm:$0xf]
    %v85 = vld [vmem:[#allocation5 + $0x4] sm:$0xf]
    %v86 = vld [vmem:[#allocation5 + $0x8] sm:$0xf]
    %v87 = vld [vmem:[#allocation5 + $0xc] sm:$0xf]
    %v88 = vld [vmem:[%s2] sm:$0x1]
    %v90 = vperm.slane %v88, 0
    %v96 = vunpack.c.l.b16 %v84
    %v97 = vunpack.c.l.b16 %v85
    %v98 = vunpack.c.l.b16 %v86
    %v99 = vunpack.c.l.b16 %v87
    %v100 = vpack.c.b16 %v97, %v96
    %v101 = vpack.c.b16 %v99, %v98
    %vm104 = vcmask 261120
    %v106 = vsel %vm104, %v83, 0
    %108 = vmatpush.bf16.msra.mxu0 0
    %109 = vmatpush.bf16.msra.mxu0 0
    %110 = vmatpush.bf16.msra.mxu0 0
    %111 = vmatpush.bf16.msra.mxu0 0
    %112 = vmatpush.bf16.msra.mxu0 0
    %113 = vmatpush.bf16.msra.mxu0 0
    %114 = vmatpush.bf16.msra.mxu0 %v101
    %115 = vmatpush.bf16.msra.mxu0 %v100
    %116 = vmatmul.bf16.gmra.mxu0 %v106
    %v117 = vpop.f32.mrf.mxu0
    %v118 = vadd.f32 %v90, %v117
    %v119 = vpop.f32.mrf.mxu0
    %120 = vdwg.mxu0
    %v121 = vsub.f32 0.0, %v118
    %v122 = vmax.f32 %v121, 0.0
    %v123 = vand.u32 2147483647, %v118
    %v124 = vsub.f32 0.0, %v123
    %v125 = vmul.f32 %v124, 1.442695
    %v126 = vpow.pop %v125
    %v127 = vadd.f32 %v126, 1.0
    %v128 = vlog2.pop %v127
    %v129 = vmul.f32 %v128, 0.6931472
    %v130 = vadd.f32 %v122, %v129
    %v131 = vsub.f32 0.0, %v130
    %v132 = vsub.f32 %v131, %v118
    %v133 = vpack.c.bf16 %v131, %v131
    %v134 = vpack.c.bf16 %v132, %v132
    %v135 = vld [vmem:[#allocation7] sm:$0xf]
    %v136 = vld [vmem:[#allocation7 + $0x4] sm:$0xf]
    %v137 = vld [vmem:[#allocation7 + $0x8] sm:$0xf]
    %v138 = vld [vmem:[#allocation7 + $0xc] sm:$0xf]
    %v139 = vld [vmem:[#allocation7 + $0x10] sm:$0xf]
    %v140 = vld [vmem:[#allocation7 + $0x14] sm:$0xf]
    %v141 = vld [vmem:[#allocation7 + $0x18] sm:$0xf]
    %v142 = vld [vmem:[#allocation7 + $0x1c] sm:$0xf]
    %v143 = vld [vmem:[#allocation7 + $0x20] sm:$0xf]
    %v144 = vld [vmem:[#allocation7 + $0x24] sm:$0xf]
    %v145 = vld [vmem:[#allocation7 + $0x28] sm:$0xf]
    %v146 = vld [vmem:[#allocation7 + $0x2c] sm:$0xf]
    %v147 = vld [vmem:[#allocation7 + $0x30] sm:$0xf]
    %v148 = vld [vmem:[#allocation7 + $0x34] sm:$0xf]
    %v149 = vld [vmem:[#allocation7 + $0x38] sm:$0xf]
    %v150 = vld [vmem:[#allocation7 + $0x3c] sm:$0xf]
    %v151 = vld [vmem:[#allocation7 + $0x40] sm:$0xf]
    %v152 = vld [vmem:[#allocation7 + $0x44] sm:$0xf]
    %v153 = vld [vmem:[#allocation7 + $0x48] sm:$0xf]
    %v154 = vld [vmem:[#allocation7 + $0x4c] sm:$0xf]
    %v155 = vld [vmem:[#allocation7 + $0x50] sm:$0xf]
    %v156 = vld [vmem:[#allocation7 + $0x54] sm:$0xf]
    %v157 = vld [vmem:[#allocation7 + $0x58] sm:$0xf]
    %v158 = vld [vmem:[#allocation7 + $0x5c] sm:$0xf]
    %v159 = vld [vmem:[#allocation7 + $0x60] sm:$0xf]
    %v160 = vld [vmem:[#allocation7 + $0x64] sm:$0xf]
    %v161 = vld [vmem:[#allocation7 + $0x68] sm:$0xf]
    %v162 = vld [vmem:[#allocation7 + $0x6c] sm:$0xf]
    %v163 = vld [vmem:[#allocation7 + $0x70] sm:$0xf]
    %v164 = vld [vmem:[#allocation7 + $0x74] sm:$0xf]
    %v165 = vld [vmem:[#allocation7 + $0x78] sm:$0xf]
    %v166 = vld [vmem:[#allocation7 + $0x7c] sm:$0xf]
    %v199 = vunpack.c.l.b16 %v135
    %v200 = vunpack.c.l.b16 %v136
    %v201 = vunpack.c.l.b16 %v137
    %v202 = vunpack.c.l.b16 %v138
    %v203 = vunpack.c.l.b16 %v139
    %v204 = vunpack.c.l.b16 %v140
    %v205 = vunpack.c.l.b16 %v141
    %v206 = vunpack.c.l.b16 %v142
    %v207 = vunpack.c.l.b16 %v143
    %v208 = vunpack.c.l.b16 %v144
    %v209 = vunpack.c.l.b16 %v145
    %v210 = vunpack.c.l.b16 %v146
    %v211 = vunpack.c.l.b16 %v147
    %v212 = vunpack.c.l.b16 %v148
    %v213 = vunpack.c.l.b16 %v149
    %v214 = vunpack.c.l.b16 %v150
    %v215 = vunpack.c.l.b16 %v151
    %v216 = vunpack.c.l.b16 %v152
    %v217 = vunpack.c.l.b16 %v153
    %v218 = vunpack.c.l.b16 %v154
    %v219 = vunpack.c.l.b16 %v155
    %v220 = vunpack.c.l.b16 %v156
    %v221 = vunpack.c.l.b16 %v157
    %v222 = vunpack.c.l.b16 %v158
    %v223 = vunpack.c.l.b16 %v159
    %v224 = vunpack.c.l.b16 %v160
    %v225 = vunpack.c.l.b16 %v161
    %v226 = vunpack.c.l.b16 %v162
    %v227 = vunpack.c.l.b16 %v163
    %v228 = vunpack.c.l.b16 %v164
    %v229 = vunpack.c.l.b16 %v165
    %v230 = vunpack.c.l.b16 %v166
    %v231 = vpack.c.b16 %v200, %v199
    %v232 = vpack.c.b16 %v202, %v201
    %v233 = vpack.c.b16 %v204, %v203
    %v234 = vpack.c.b16 %v206, %v205
    %v235 = vpack.c.b16 %v208, %v207
    %v236 = vpack.c.b16 %v210, %v209
    %v237 = vpack.c.b16 %v212, %v211
    %v238 = vpack.c.b16 %v214, %v213
    %v239 = vpack.c.b16 %v216, %v215
    %v240 = vpack.c.b16 %v218, %v217
    %v241 = vpack.c.b16 %v220, %v219
    %v242 = vpack.c.b16 %v222, %v221
    %v243 = vpack.c.b16 %v224, %v223
    %v244 = vpack.c.b16 %v226, %v225
    %v245 = vpack.c.b16 %v228, %v227
    %v246 = vpack.c.b16 %v230, %v229
    %263 = vmatpush.bf16.msra.mxu0 %v238
    %264 = vmatpush.bf16.msra.mxu0 %v237
    %265 = vmatpush.bf16.msra.mxu0 %v236
    %266 = vmatpush.bf16.msra.mxu0 %v235
    %267 = vmatpush.bf16.msra.mxu0 %v234
    %268 = vmatpush.bf16.msra.mxu0 %v233
    %269 = vmatpush.bf16.msra.mxu0 %v232
    %270 = vmatpush.bf16.msra.mxu0 %v231
    %271 = vmatmul.bf16.gmra.mxu0 %v133
    %v272 = vpop.f32.mrf.mxu0
    %v273 = vadd.f32 0.0, %v272
    %v274 = vpop.f32.mrf.mxu0
    %275 = vdwg.mxu0
    %276 = vmatpush.bf16.msra.mxu0 %v246
    %277 = vmatpush.bf16.msra.mxu0 %v245
    %278 = vmatpush.bf16.msra.mxu0 %v244
    %279 = vmatpush.bf16.msra.mxu0 %v243
    %280 = vmatpush.bf16.msra.mxu0 %v242
    %281 = vmatpush.bf16.msra.mxu0 %v241
    %282 = vmatpush.bf16.msra.mxu0 %v240
    %283 = vmatpush.bf16.msra.mxu0 %v239
    %284 = vmatmul.bf16.gmra.mxu0 %v134
    %v285 = vpop.f32.mrf.mxu0
    %v286 = vadd.f32 %v273, %v285
    %v287 = vpop.f32.mrf.mxu0
    %288 = vdwg.mxu0
    %v289 = vmul.f32 %v286, 1.442695
    %v290 = vpow.pop %v289
    %v291 = vpack.c.bf16 %v290, %v290
    %v292 = vld [vmem:[#allocation8] sm:$0xf]
    %v293 = vld [vmem:[#allocation8 + $0x4] sm:$0xf]
    %v294 = vld [vmem:[#allocation8 + $0x8] sm:$0xf]
    %v295 = vld [vmem:[#allocation8 + $0xc] sm:$0xf]
    %v296 = vld [vmem:[#allocation8 + $0x10] sm:$0xf]
    %v297 = vld [vmem:[#allocation8 + $0x14] sm:$0xf]
    %v298 = vld [vmem:[#allocation8 + $0x18] sm:$0xf]
    %v299 = vld [vmem:[#allocation8 + $0x1c] sm:$0xf]
    %v300 = vld [vmem:[#allocation8 + $0x20] sm:$0xf]
    %v301 = vld [vmem:[#allocation8 + $0x24] sm:$0xf]
    %v302 = vld [vmem:[#allocation8 + $0x28] sm:$0xf]
    %v303 = vld [vmem:[#allocation8 + $0x2c] sm:$0xf]
    %v304 = vld [vmem:[#allocation8 + $0x30] sm:$0xf]
    %v305 = vld [vmem:[#allocation8 + $0x34] sm:$0xf]
    %v306 = vld [vmem:[#allocation8 + $0x38] sm:$0xf]
    %v307 = vld [vmem:[#allocation8 + $0x3c] sm:$0xf]
    %v324 = vunpack.c.l.b16 %v292
    %v325 = vunpack.c.l.b16 %v293
    %v326 = vunpack.c.l.b16 %v294
    %v327 = vunpack.c.l.b16 %v295
    %v328 = vunpack.c.l.b16 %v296
    %v329 = vunpack.c.l.b16 %v297
    %v330 = vunpack.c.l.b16 %v298
    %v331 = vunpack.c.l.b16 %v299
    %v332 = vunpack.c.l.b16 %v300
    %v333 = vunpack.c.l.b16 %v301
    %v334 = vunpack.c.l.b16 %v302
    %v335 = vunpack.c.l.b16 %v303
    %v336 = vunpack.c.l.b16 %v304
    %v337 = vunpack.c.l.b16 %v305
    %v338 = vunpack.c.l.b16 %v306
    %v339 = vunpack.c.l.b16 %v307
    %v340 = vpack.c.b16 %v325, %v324
    %v341 = vpack.c.b16 %v327, %v326
    %v342 = vpack.c.b16 %v329, %v328
    %v343 = vpack.c.b16 %v331, %v330
    %v344 = vpack.c.b16 %v333, %v332
    %v345 = vpack.c.b16 %v335, %v334
    %v346 = vpack.c.b16 %v337, %v336
    %v347 = vpack.c.b16 %v339, %v338
    %356 = vmatpush.bf16.msra.mxu0 %v347
    %357 = vmatpush.bf16.msra.mxu0 %v346
    %358 = vmatpush.bf16.msra.mxu0 %v345
    %359 = vmatpush.bf16.msra.mxu0 %v344
    %360 = vmatpush.bf16.msra.mxu0 %v343
    %361 = vmatpush.bf16.msra.mxu0 %v342
    %362 = vmatpush.bf16.msra.mxu0 %v341
    %363 = vmatpush.bf16.msra.mxu0 %v340
    %364 = vmatmul.bf16.gmra.mxu0 %v291
    %v365 = vpop.f32.mrf.mxu0
    %v366 = vadd.f32 0.0, %v365
    %v367 = vpop.f32.mrf.mxu0
    %368 = vdwg.mxu0
    %369 = vst [vmem:[#allocation10] sm:$0xff] %v366
    // Predicated region
    $region38: #{tpu_custom_call.1} parent=1 // pred_check
      _
    $region39: #{tpu_custom_call.1} parent=1 // pred_check_branch
      %371 = sbr.rel (0) target = $region41
    $region40: #{tpu_custom_call.1} parent=1 // pred_region
      %373 = vsyncadd [#allocation4], 0
      %s375 = sshll.u32 [#allocation10], 4
      %s376 = int_to_ptr.vmem [resolvable:$true] %s375
      %s377 = sshll.u32 %s5, 4
      %s378 = int_to_ptr.hbm [resolvable:$true] %s377
      %380 = dma.vmem_to_hbm [thread:$0]  %s376, 128, %s378, [#allocation4]
    $region41: #{tpu_custom_call.1} parent=1 // pred_fallthru
      _
    // Predicated region
    $region42: #{tpu_custom_call.1} parent=1 // pred_check
      _
    $region43: #{tpu_custom_call.1} parent=1 // pred_check_branch
      %382 = sbr.rel (0) target = $region45
    $region44: #{tpu_custom_call.1} parent=1 // pred_region
      %384 = dma.done [#allocation4], 128
    $region45: #{tpu_custom_call.1} parent=1 // pred_fallthru
      _
    %385 = vsyncpa [#allocation3], 1
    %386 = vsyncpa [#allocation6], 1
    %387 = vsyncpa [#allocation9], 1
    %388 = vsyncpa [#allocation4], 1

</llo_original>
